<compile_context>
chip_gen: v5e
topology: v5e:2x2
jax: 0.10.0
libtpu: 0.0.40
codegen_flags: <defaults>
</compile_context>

<pallas_src>
from typing import NamedTuple

import jax
import jax.numpy as jnp
from jax.experimental import pallas as pl
from jax.experimental.pallas import tpu as pltpu


def _round_up(x: int, m: int) -> int:
    return ((x + m - 1) // m) * m


# ----------------------------------------------------------------------------
# Kernels
# ----------------------------------------------------------------------------
def _mlp_kernel_acc(x_ref, w1_ref, b1_ref, w2_ref, b2_ref, o_ref, acc_ref):
    """General path: f32 scratch accumulator, cast to o_ref.dtype at the end."""
    h_idx = pl.program_id(2)

    @pl.when(h_idx == 0)
    def _init():
        acc_ref[...] = jnp.zeros_like(acc_ref)

    # linear1 on one hidden chunk: [tm, dim_p] @ [dim_p, th] -> f32 [tm, th]
    h = jnp.dot(x_ref[...], w1_ref[...], preferred_element_type=jnp.float32)
    h = jnp.maximum(h + b1_ref[...], 0.0)      # bias + ReLU (Dropout(0) == id)

    # linear2 partial sum: [tm, th] @ [th, tn], accumulated in f32.
    acc_ref[...] += jnp.dot(h.astype(w2_ref.dtype), w2_ref[...],
                            preferred_element_type=jnp.float32)

    @pl.when(h_idx == pl.num_programs(2) - 1)
    def _finalize():
        o_ref[...] = (acc_ref[...] + b2_ref[...]).astype(o_ref.dtype)


def _mlp_kernel_f32out(x_ref, w1_ref, b1_ref, w2_ref, b2_ref, o_ref):
    """f32 output: accumulate directly into the resident output block
    (saves a [tm, tn] f32 scratch plus the finalize copy)."""
    h_idx = pl.program_id(2)

    @pl.when(h_idx == 0)
    def _init():
        o_ref[...] = jnp.zeros_like(o_ref)

    h = jnp.dot(x_ref[...], w1_ref[...], preferred_element_type=jnp.float32)
    h = jnp.maximum(h + b1_ref[...], 0.0)
    o_ref[...] += jnp.dot(h.astype(w2_ref.dtype), w2_ref[...],
                          preferred_element_type=jnp.float32)

    @pl.when(h_idx == pl.num_programs(2) - 1)
    def _finalize():
        o_ref[...] += b2_ref[...]


# ----------------------------------------------------------------------------
# Parameter preparation (pad/cast once, outside the per-call hot path)
# ----------------------------------------------------------------------------
class PreparedMLPParams(NamedTuple):
    w1p: jax.Array       # [dim_p, hid_p]  compute dtype
    b1p: jax.Array       # [1, hid_p]      f32
    w2p: jax.Array       # [hid_p, dim_p]  compute dtype
    b2p: jax.Array       # [1, dim_p]      f32
    dim: int
    hidden: int
    dim_p: int
    hid_p: int
    th: int
    num_h: int
    compute_dtype: jnp.dtype


def prepare_mlp_params(w1, b1, w2, b2, *, compute_dtype=jnp.bfloat16,
                       th_target=512) -> PreparedMLPParams:
    """Pads + casts weights once. w1: [dim, hidden], w2: [hidden, dim]."""
    dim, hidden = w1.shape
    assert w2.shape == (hidden, dim), (w1.shape, w2.shape)
    cdt = jnp.dtype(compute_dtype)

    dim_p = _round_up(dim, 128)
    # Hidden tile th chosen to evenly divide the padded hidden dim
    # (e.g. hidden=640 -> th=384, hid_p=768 instead of th=512, hid_p=1024).
    hid0 = _round_up(hidden, 128)
    num_h = pl.cdiv(hid0, max(128, _round_up(th_target, 128)))
    th = _round_up(pl.cdiv(hid0, num_h), 128)
    hid_p = th * num_h

    w1p = jnp.pad(w1.astype(cdt), ((0, dim_p - dim), (0, hid_p - hidden)))
    w2p = jnp.pad(w2.astype(cdt), ((0, hid_p - hidden), (0, dim_p - dim)))
    b1p = jnp.pad(jnp.asarray(b1, jnp.float32).reshape(1, -1),
                  ((0, 0), (0, hid_p - hidden)))
    b2p = jnp.pad(jnp.asarray(b2, jnp.float32).reshape(1, -1),
                  ((0, 0), (0, dim_p - dim)))
    return PreparedMLPParams(w1p, b1p, w2p, b2p, dim, hidden, dim_p, hid_p,
                             th, num_h, cdt)


def _vmem_budget():
    """Per-generation usable VMEM (bytes), with headroom for the compiler."""
    cap = 128 << 20
    try:
        info = pltpu.get_tpu_info()
        cap = int(getattr(info, "vmem_capacity_bytes", cap)) or cap
    except Exception:
        pass
    return cap, int(cap * 0.82)    # ~105 MiB on v5e/v6e, ~52 MiB on v7x


# ----------------------------------------------------------------------------
# Wrapper
# ----------------------------------------------------------------------------
def mlp_pallas(x, params: PreparedMLPParams, *, tm=None, tn=None):
    """y = relu(x @ W1 + b1) @ W2 + b2 with pre-padded params. x: [..., dim]."""
    p = params
    orig_shape = x.shape
    dim = orig_shape[-1]
    assert dim == p.dim, (dim, p.dim)
    x2 = x.reshape(-1, dim)
    M = x2.shape[0]

    cdt = p.compute_dtype
    csz = cdt.itemsize
    out_dtype = jnp.dtype(x.dtype)
    osz = out_dtype.itemsize
    out_is_f32 = out_dtype == jnp.dtype(jnp.float32)

    vmem_cap, budget = _vmem_budget()

    # --- batch tile (rows): multiple of 16, larger on 128 MiB-VMEM chips ---
    def pick_batch_tile(target):
        t = max(16, min(_round_up(target, 16), _round_up(M, 16)))
        n_m = pl.cdiv(M, t)
        t = max(16, min(t, _round_up(pl.cdiv(M, n_m), 16)))
        return t, n_m, n_m * t

    tm_target = tm if tm is not None else (768 if budget >= (96 << 20) else 512)
    tm_, num_m, m_p = pick_batch_tile(tm_target)

    # --- VMEM footprint model (double-buffered blocks + intermediates) ---
    def vmem_need(tm_v, tn_v):
        b = 2 * tm_v * p.dim_p * csz            # x tile
        b += 2 * p.dim_p * p.th * csz           # W1 chunk
        b += 2 * p.th * 4                       # b1 chunk
        b += 2 * p.th * tn_v * csz              # W2 chunk
        b += 2 * tn_v * 4                       # b2 chunk
        b += 2 * tm_v * tn_v * osz              # output block
        if not out_is_f32:
            b += tm_v * tn_v * 4                # f32 accumulator scratch
        b += tm_v * p.th * (4 + csz)            # [tm, th] intermediate + cast
        b += 2 << 20                            # Mosaic-internal scratch
        return b

    # --- output-dim tile: as large as fits (tn == dim_p => the first matmul
    #     is computed exactly once per batch tile; shrinking tn trades FLOP
    #     recompute for VMEM fit and is only used when necessary) ---
    def pick_tn(tm_v):
        if tn is not None:
            assert tn % 128 == 0 and p.dim_p % tn == 0, (tn, p.dim_p)
            return tn
        cands = [t for t in range(p.dim_p, 0, -128) if p.dim_p % t == 0]
        for t in cands:
            if vmem_need(tm_v, t) <= budget:
                return t
        return cands[-1]

    tn_ = pick_tn(tm_)
    while vmem_need(tm_, tn_) > budget and tm_ > 16:
        shrunk = max(16, (tm_ // 2) // 16 * 16)
        if shrunk == tm_:
            break
        tm_, num_m, m_p = pick_batch_tile(shrunk)
        tn_ = pick_tn(tm_)
    # TODO(synk): for extreme dim where the x tile / W1 chunk alone exceed the
    # budget, a K-tiling axis over dim_p would also be required.
    num_n = p.dim_p // tn_

    need_bytes = vmem_need(tm_, tn_)
    vmem_limit = int(min(max(need_bytes + (4 << 20), 32 << 20), vmem_cap))

    # Activations are padded per call; weights were padded once in prepare().
    xp = jnp.pad(x2.astype(cdt), ((0, m_p - M), (0, p.dim_p - dim)))

    # Cost estimate reflecting actual streaming.
    flops = 2 * m_p * p.dim_p * p.hid_p * (num_n + 1)
    bytes_accessed = (
        m_p * p.dim_p * csz                               # x, read once
        + num_m * num_n * p.dim_p * p.hid_p * csz         # W1, per (m, n) tile
        + num_m * p.hid_p * p.dim_p * csz                 # W2, per m tile
        + num_m * num_n * (p.hid_p + tn_) * 4             # biases
        + m_p * p.dim_p * osz                             # output, written once
    )
    cost = pl.CostEstimate(flops=int(flops), transcendentals=0,
                           bytes_accessed=int(bytes_accessed))

    kernel = _mlp_kernel_f32out if out_is_f32 else _mlp_kernel_acc
    scratch = () if out_is_f32 else (pltpu.VMEM((tm_, tn_), jnp.float32),)

    out_p = pl.pallas_call(
        kernel,
        out_shape=jax.ShapeDtypeStruct((m_p, p.dim_p), out_dtype),
        grid_spec=pltpu.PrefetchScalarGridSpec(
            num_scalar_prefetch=0,
            grid=(num_m, num_n, p.num_h),
            in_specs=[
                pl.BlockSpec((tm_, p.dim_p), lambda i, n, h: (i, 0)),    # x
                pl.BlockSpec((p.dim_p, p.th), lambda i, n, h: (0, h)),   # W1
                pl.BlockSpec((1, p.th), lambda i, n, h: (0, h)),         # b1
                pl.BlockSpec((p.th, tn_), lambda i, n, h: (h, n)),       # W2
                pl.BlockSpec((1, tn_), lambda i, n, h: (0, n)),          # b2
            ],
            out_specs=pl.BlockSpec((tm_, tn_), lambda i, n, h: (i, n)),
            scratch_shapes=scratch,
        ),
        compiler_params=pltpu.CompilerParams(
            dimension_semantics=("parallel", "parallel", "arbitrary"),
            vmem_limit_bytes=vmem_limit,
        ),
        cost_estimate=cost,
    )(xp, p.w1p, p.b1p, p.w2p, p.b2p)

    y = out_p[:M, :dim]
    return y.reshape(orig_shape[:-1] + (dim,))


# ----------------------------------------------------------------------------
# Demo / self-test
# ----------------------------------------------------------------------------
def init_params(key, dim):
    """torch.nn.Linear-style init (uniform +/- 1/sqrt(fan_in)); weights stored
    pre-transposed to [in, out]."""
    hidden = dim * 4
    k1, k2, k3, k4 = jax.random.split(key, 4)
    bound1 = 1.0 / (dim ** 0.5)
    bound2 = 1.0 / (hidden ** 0.5)
    w1 = jax.random.uniform(k1, (dim, hidden), jnp.float32, -bound1, bound1)
    b1 = jax.random.uniform(k2, (hidden,), jnp.float32, -bound1, bound1)
    w2 = jax.random.uniform(k3, (hidden, dim), jnp.float32, -bound2, bound2)
    b2 = jax.random.uniform(k4, (dim,), jnp.float32, -bound2, bound2)
    return w1, b1, w2, b2


def ref_mlp(x, w1, b1, w2, b2):
    h = jnp.maximum(
        jnp.dot(x, w1, precision=jax.lax.Precision.HIGHEST) + b1, 0.0)
    return jnp.dot(h, w2, precision=jax.lax.Precision.HIGHEST) + b2


if __name__ == "__main__":
    key = jax.random.PRNGKey(0)
    batch, dim = 8, 32                       # hidden = dim * 4 = 128

    kx, kp = jax.random.split(key)
    x = jax.random.normal(kx, (batch, dim), jnp.float32)
    w1, b1, w2, b2 = init_params(kp, dim)

    ref = ref_mlp(x, w1, b1, w2, b2)

    # f32 compute / f32 output: direct-accumulate-into-output kernel.
    prep_f32 = prepare_mlp_params(w1, b1, w2, b2, compute_dtype=jnp.float32)
    out = jax.block_until_ready(mlp_pallas(x, prep_f32))
    assert out.shape == (batch, dim)
    assert jnp.allclose(out, ref, atol=1e-4, rtol=1e-4), \
        float(jnp.max(jnp.abs(out - ref)))

    # bf16 MXU operands with f32 accumulation (fast path on v6e/v7x).
    prep_bf16 = prepare_mlp_params(w1, b1, w2, b2, compute_dtype=jnp.bfloat16)
    out_bf16 = jax.block_until_ready(mlp_pallas(x, prep_bf16))
    assert out_bf16.shape == (batch, dim)
    assert jnp.allclose(out_bf16, ref, atol=5e-2, rtol=5e-2)

    # bf16 output exercises the scratch-accumulator kernel variant.
    out_b16 = jax.block_until_ready(
        mlp_pallas(x.astype(jnp.bfloat16), prep_bf16))
    assert out_b16.dtype == jnp.bfloat16
    assert jnp.allclose(out_b16.astype(jnp.float32), ref, atol=1e-1, rtol=1e-1)

    print("KERNEL_OK")
</pallas_src>

<mosaic_0001>
module attributes {stable_mosaic.version = 11 : i64} {
  func.func @_mlp_kernel_f32out(%arg0: i32, %arg1: i32, %arg2: i32, %arg3: memref<16x128xf32, #tpu.memory_space<vmem>>, %arg4: memref<128x128xf32, #tpu.memory_space<vmem>>, %arg5: memref<1x128xf32, #tpu.memory_space<vmem>>, %arg6: memref<128x128xf32, #tpu.memory_space<vmem>>, %arg7: memref<1x128xf32, #tpu.memory_space<vmem>>, %arg8: memref<16x128xf32, #tpu.memory_space<vmem>>) attributes {dimension_semantics = [#tpu.dimension_semantics<parallel>, #tpu.dimension_semantics<parallel>, #tpu.dimension_semantics<arbitrary>], iteration_bounds = array<i64: 1, 1, 1>, scalar_prefetch = 0 : i64, scratch_operands = 0 : i64, tpu.core_type = #tpu.core_type<tc>, window_params = [{transform_indices = @transform_0, window_bounds = array<i64: 16, 128>}, {transform_indices = @transform_1, window_bounds = array<i64: 128, 128>}, {transform_indices = @transform_2, window_bounds = array<i64: 1, 128>}, {transform_indices = @transform_3, window_bounds = array<i64: 128, 128>}, {transform_indices = @transform_4, window_bounds = array<i64: 1, 128>}, {transform_indices = @transform_5, window_bounds = array<i64: 16, 128>}]} {
    %c0_i32 = arith.constant 0 : i32
    %0 = arith.cmpi eq, %arg2, %c0_i32 : i32
    %1 = arith.extui %0 : i1 to i32
    %c0_i32_0 = arith.constant 0 : i32
    %2 = arith.cmpi ne, %1, %c0_i32_0 : i32
    scf.if %2 {
      %cst_16 = arith.constant 0.000000e+00 : f32
      %19 = vector.broadcast %cst_16 : f32 to vector<16x128xf32>
      %c0_17 = arith.constant 0 : index
      %c0_18 = arith.constant 0 : index
      %20 = vector.load %arg8[%c0_17, %c0_18] : memref<16x128xf32, #tpu.memory_space<vmem>>, vector<16x128xf32>
      tpu.vector_store %arg8[%c0_17, %c0_18], %19 {strides = array<i32>} : memref<16x128xf32, #tpu.memory_space<vmem>>, vector<16x128xf32>,
    } else {
    }
    %c0 = arith.constant 0 : index
    %c0_1 = arith.constant 0 : index
    %3 = vector.load %arg3[%c0, %c0_1] : memref<16x128xf32, #tpu.memory_space<vmem>>, vector<16x128xf32>
    %c0_2 = arith.constant 0 : index
    %c0_3 = arith.constant 0 : index
    %4 = vector.load %arg4[%c0_2, %c0_3] : memref<128x128xf32, #tpu.memory_space<vmem>>, vector<128x128xf32>
    %cst = arith.constant dense<0.000000e+00> : vector<16x128xf32>
    %5 = tpu.matmul %3, %4, %cst {dimension_numbers = #tpu.dot_dimension_numbers<[1], [0], [0], [1], [0, 0, 1, 1], [], []>} : vector<16x128xf32>, vector<128x128xf32>, vector<16x128xf32> -> vector<16x128xf32>
    %c0_4 = arith.constant 0 : index
    %c0_5 = arith.constant 0 : index
    %6 = vector.load %arg5[%c0_4, %c0_5] : memref<1x128xf32, #tpu.memory_space<vmem>>, vector<1x128xf32>
    %7 = vector.broadcast %6 : vector<1x128xf32> to vector<16x128xf32>
    %8 = arith.addf %5, %7 : vector<16x128xf32>
    %cst_6 = arith.constant 0.000000e+00 : f32
    %9 = vector.broadcast %cst_6 : f32 to vector<16x128xf32>
    %10 = arith.maximumf %8, %9 : vector<16x128xf32>
    %c0_7 = arith.constant 0 : index
    %c0_8 = arith.constant 0 : index
    %11 = vector.load %arg8[%c0_7, %c0_8] : memref<16x128xf32, #tpu.memory_space<vmem>>, vector<16x128xf32>
    %c0_9 = arith.constant 0 : index
    %c0_10 = arith.constant 0 : index
    %12 = vector.load %arg6[%c0_9, %c0_10] : memref<128x128xf32, #tpu.memory_space<vmem>>, vector<128x128xf32>
    %cst_11 = arith.constant dense<0.000000e+00> : vector<16x128xf32>
    %13 = tpu.matmul %10, %12, %cst_11 {dimension_numbers = #tpu.dot_dimension_numbers<[1], [0], [0], [1], [0, 0, 1, 1], [], []>} : vector<16x128xf32>, vector<128x128xf32>, vector<16x128xf32> -> vector<16x128xf32>
    %14 = arith.addf %11, %13 : vector<16x128xf32>
    %c0_12 = arith.constant 0 : index
    %c0_13 = arith.constant 0 : index
    %15 = vector.load %arg8[%c0_12, %c0_13] : memref<16x128xf32, #tpu.memory_space<vmem>>, vector<16x128xf32>
    tpu.vector_store %arg8[%c0_12, %c0_13], %14 {strides = array<i32>} : memref<16x128xf32, #tpu.memory_space<vmem>>, vector<16x128xf32>,
    %c0_i32_14 = arith.constant 0 : i32
    %16 = arith.cmpi eq, %arg2, %c0_i32_14 : i32
    %17 = arith.extui %16 : i1 to i32
    %c0_i32_15 = arith.constant 0 : i32
    %18 = arith.cmpi ne, %17, %c0_i32_15 : i32
    scf.if %18 {
      %c0_16 = arith.constant 0 : index
      %c0_17 = arith.constant 0 : index
      %19 = vector.load %arg8[%c0_16, %c0_17] : memref<16x128xf32, #tpu.memory_space<vmem>>, vector<16x128xf32>
      %c0_18 = arith.constant 0 : index
      %c0_19 = arith.constant 0 : index
      %20 = vector.load %arg7[%c0_18, %c0_19] : memref<1x128xf32, #tpu.memory_space<vmem>>, vector<1x128xf32>
      %21 = vector.broadcast %20 : vector<1x128xf32> to vector<16x128xf32>
      %22 = arith.addf %19, %21 : vector<16x128xf32>
      %c0_20 = arith.constant 0 : index
      %c0_21 = arith.constant 0 : index
      %23 = vector.load %arg8[%c0_20, %c0_21] : memref<16x128xf32, #tpu.memory_space<vmem>>, vector<16x128xf32>
      tpu.vector_store %arg8[%c0_20, %c0_21], %22 {strides = array<i32>} : memref<16x128xf32, #tpu.memory_space<vmem>>, vector<16x128xf32>,
    } else {
    }
    return
  }
  func.func @transform_0(%arg0: i32, %arg1: i32, %arg2: i32) -> (i32, i32) {
    %c0_i32 = arith.constant 0 : i32
    %c0_i32_0 = arith.constant 0 : i32
    return %arg0, %c0_i32 : i32, i32
  }
  func.func @transform_1(%arg0: i32, %arg1: i32, %arg2: i32) -> (i32, i32) {
    %c0_i32 = arith.constant 0 : i32
    %c0_i32_0 = arith.constant 0 : i32
    return %c0_i32, %arg2 : i32, i32
  }
  func.func @transform_2(%arg0: i32, %arg1: i32, %arg2: i32) -> (i32, i32) {
    %c0_i32 = arith.constant 0 : i32
    %c0_i32_0 = arith.constant 0 : i32
    return %c0_i32, %arg2 : i32, i32
  }
  func.func @transform_3(%arg0: i32, %arg1: i32, %arg2: i32) -> (i32, i32) {
    %c0_i32 = arith.constant 0 : i32
    return %arg2, %arg1 : i32, i32
  }
  func.func @transform_4(%arg0: i32, %arg1: i32, %arg2: i32) -> (i32, i32) {
    %c0_i32 = arith.constant 0 : i32
    %c0_i32_0 = arith.constant 0 : i32
    return %c0_i32, %arg1 : i32, i32
  }
  func.func @transform_5(%arg0: i32, %arg1: i32, %arg2: i32) -> (i32, i32) {
    %c0_i32 = arith.constant 0 : i32
    return %arg0, %arg1 : i32, i32
  }
}

</mosaic_0001>

<llo_original>
// kernel: tpu_custom_call.1
$region0: #{tpu_custom_call.1}
  #allocation0 [shape = 'u32[]', space=smem, size = 0x4, offset = 0x4, fixed_abs, tag = 'smem constant byte address 0x4 - core index']
  #allocation1 [shape = 'u32[72,128]{1,0:T(1,128)}', space=vmem, size = 0x9000, scoped, tag = 'internal scratch']
  %s0 = inlined_call_operand.hbm [shape: f32[16,128], index: 0, kind: input, shape index: {}]
  %s1 = inlined_call_operand.hbm [shape: f32[128,128], index: 1, kind: input, shape index: {}]
  %s2 = inlined_call_operand.vmem [shape: f32[1,128], index: 2, kind: input, shape index: {}]
  %s3 = inlined_call_operand.hbm [shape: f32[128,128], index: 3, kind: input, shape index: {}]
  %s4 = inlined_call_operand.vmem [shape: f32[1,128], index: 4, kind: input, shape index: {}]
  %s5 = inlined_call_operand.hbm [shape: f32[16,128], index: 5, kind: output, shape index: {}]
  %s6 = sld [smem:[#allocation0]]
  $region50: #{tpu_custom_call.1} parent=0
    _
  %s8 = ssub.s32 1, %s6
  %s9 = scalar_select 0, %s8, %s6
  $region1: #{tpu_custom_call.1} parent=0
    #allocation2 [shape = 'u8[8192]{0}', space=vmem, size = 0x2000, scoped, tag = 'input window, operand 0, single buffered']
    #allocation3 [shape = 's32[1]{0}', space=sflag, size = 0x4, scoped, tag = 'scoped memory for tpu_custom_call.1']
    #allocation4 [shape = 's32[1]{0}', space=sflag, size = 0x4, scoped, tag = 'scoped memory for tpu_custom_call.1']
    #allocation5 [shape = 'u8[65536]{0}', space=vmem, size = 0x10000, scoped, tag = 'input window, operand 1, single buffered']
    #allocation6 [shape = 's32[1]{0}', space=sflag, size = 0x4, scoped, tag = 'scoped memory for tpu_custom_call.1']
    #allocation7 [shape = 'u8[65536]{0}', space=vmem, size = 0x10000, scoped, tag = 'input window, operand 3, single buffered']
    #allocation8 [shape = 'u8[8192]{0}', space=vmem, size = 0x2000, scoped, tag = 'output window, operand 0, single buffered']
    %10 = vsyncpa [#allocation3], 0
    %11 = vsyncpa [#allocation6], 0
    %12 = vsyncpa [#allocation4], 0
    // Predicated region
    $region2: #{tpu_custom_call.1} parent=1 // pred_check
      _
    $region3: #{tpu_custom_call.1} parent=1 // pred_check_branch
      %14 = sbr.rel (0) target = $region5
    $region4: #{tpu_custom_call.1} parent=1 // pred_region
      %16 = vsyncadd [#allocation3], 0
      %s17 = sshll.u32 %s0, 4
      %s18 = int_to_ptr.hbm [resolvable:$true] %s17
      %s19 = sshll.u32 [#allocation2], 4
      %s20 = int_to_ptr.vmem [resolvable:$true] %s19
      %25 = dma.hbm_to_vmem [thread:$0]  %s18, 256, %s20, [#allocation3], 128, 128, 8
    $region5: #{tpu_custom_call.1} parent=1 // pred_fallthru
      _
    // Predicated region
    $region6: #{tpu_custom_call.1} parent=1 // pred_check
      _
    $region7: #{tpu_custom_call.1} parent=1 // pred_check_branch
      %27 = sbr.rel (0) target = $region9
    $region8: #{tpu_custom_call.1} parent=1 // pred_region
      %29 = vsyncadd [#allocation6], 0
      %s30 = sshll.u32 %s1, 4
      %s31 = int_to_ptr.hbm [resolvable:$true] %s30
      %s32 = sshll.u32 [#allocation5], 4
      %s33 = int_to_ptr.vmem [resolvable:$true] %s32
      %38 = dma.hbm_to_vmem [thread:$0]  %s31, 2048, %s33, [#allocation6], 128, 128, 8
    $region9: #{tpu_custom_call.1} parent=1 // pred_fallthru
      _
    // Predicated region
    $region10: #{tpu_custom_call.1} parent=1 // pred_check
      _
    $region11: #{tpu_custom_call.1} parent=1 // pred_check_branch
      %40 = sbr.rel (0) target = $region13
    $region12: #{tpu_custom_call.1} parent=1 // pred_region
      _
    $region13: #{tpu_custom_call.1} parent=1 // pred_fallthru
      _
    // Predicated region
    $region14: #{tpu_custom_call.1} parent=1 // pred_check
      _
    $region15: #{tpu_custom_call.1} parent=1 // pred_check_branch
      %42 = sbr.rel (0) target = $region17
    $region16: #{tpu_custom_call.1} parent=1 // pred_region
      %44 = vsyncadd [#allocation6], 0
      %s45 = sshll.u32 %s3, 4
      %s46 = int_to_ptr.hbm [resolvable:$true] %s45
      %s47 = sshll.u32 [#allocation7], 4
      %s48 = int_to_ptr.vmem [resolvable:$true] %s47
      %53 = dma.hbm_to_vmem [thread:$0]  %s46, 2048, %s48, [#allocation6], 128, 128, 8
    $region17: #{tpu_custom_call.1} parent=1 // pred_fallthru
      _
    // Predicated region
    $region18: #{tpu_custom_call.1} parent=1 // pred_check
      _
    $region19: #{tpu_custom_call.1} parent=1 // pred_check_branch
      %55 = sbr.rel (0) target = $region21
    $region20: #{tpu_custom_call.1} parent=1 // pred_region
      _
    $region21: #{tpu_custom_call.1} parent=1 // pred_fallthru
      _
    // Predicated region
    $region22: #{tpu_custom_call.1} parent=1 // pred_check
      _
    $region23: #{tpu_custom_call.1} parent=1 // pred_check_branch
      %57 = sbr.rel (0) target = $region25
    $region24: #{tpu_custom_call.1} parent=1 // pred_region
      %59 = dma.done [#allocation3], 256
    $region25: #{tpu_custom_call.1} parent=1 // pred_fallthru
      _
    // Predicated region
    $region26: #{tpu_custom_call.1} parent=1 // pred_check
      _
    $region27: #{tpu_custom_call.1} parent=1 // pred_check_branch
      %61 = sbr.rel (0) target = $region29
    $region28: #{tpu_custom_call.1} parent=1 // pred_region
      %63 = dma.done [#allocation6], 2048
    $region29: #{tpu_custom_call.1} parent=1 // pred_fallthru
      _
    // Predicated region
    $region30: #{tpu_custom_call.1} parent=1 // pred_check
      _
    $region31: #{tpu_custom_call.1} parent=1 // pred_check_branch
      %65 = sbr.rel (0) target = $region33
    $region32: #{tpu_custom_call.1} parent=1 // pred_region
      %67 = dma.done [#allocation6], 2048
    $region33: #{tpu_custom_call.1} parent=1 // pred_fallthru
      _
    %p68 = scmp.eq.s32.totalorder 0, 0
    // Predicated region
    $region34: #{tpu_custom_call.1} parent=1 // pred_check
      %p69 = pneg %p68
    $region35: #{tpu_custom_call.1} parent=1 // pred_check_branch
      %71 = sbr.rel (%p69) target = $region37
    $region36: #{tpu_custom_call.1} parent=1 // pred_region
      %72 = vst [vmem:[#allocation8] sm:$0xff] 0.0
      %73 = vst [vmem:[#allocation8 + $0x8] sm:$0xff] 0.0
    $region37: #{tpu_custom_call.1} parent=1 // pred_fallthru
      _
    %v74 = vld [vmem:[#allocation2] sm:$0xff]
    %v75 = vld [vmem:[#allocation2 + $0x8] sm:$0xff]
    %v76 = vld [vmem:[#allocation5] sm:$0xff]
    %v77 = vld [vmem:[#allocation5 + $0x8] sm:$0xff]
    %v78 = vld [vmem:[#allocation5 + $0x10] sm:$0xff]
    %v79 = vld [vmem:[#allocation5 + $0x18] sm:$0xff]
    %v80 = vld [vmem:[#allocation5 + $0x20] sm:$0xff]
    %v81 = vld [vmem:[#allocation5 + $0x28] sm:$0xff]
    %v82 = vld [vmem:[#allocation5 + $0x30] sm:$0xff]
    %v83 = vld [vmem:[#allocation5 + $0x38] sm:$0xff]
    %v84 = vld [vmem:[#allocation5 + $0x40] sm:$0xff]
    %v85 = vld [vmem:[#allocation5 + $0x48] sm:$0xff]
    %v86 = vld [vmem:[#allocation5 + $0x50] sm:$0xff]
    %v87 = vld [vmem:[#allocation5 + $0x58] sm:$0xff]
    %v88 = vld [vmem:[#allocation5 + $0x60] sm:$0xff]
    %v89 = vld [vmem:[#allocation5 + $0x68] sm:$0xff]
    %v90 = vld [vmem:[#allocation5 + $0x70] sm:$0xff]
    %v91 = vld [vmem:[#allocation5 + $0x78] sm:$0xff]
    %v92 = vld [vmem:[%s2] sm:$0x1]
    %v94 = vperm.slane %v92, 0
    %96 = vmatpush.msra.mxu0 %v91
    %97 = vmatpush.msra.mxu0 %v90
    %98 = vmatpush.msra.mxu0 %v89
    %99 = vmatpush.msra.mxu0 %v88
    %100 = vmatpush.msra.mxu0 %v87
    %101 = vmatpush.msra.mxu0 %v86
    %102 = vmatpush.msra.mxu0 %v85
    %103 = vmatpush.msra.mxu0 %v84
    %104 = vmatpush.msra.mxu0 %v83
    %105 = vmatpush.msra.mxu0 %v82
    %106 = vmatpush.msra.mxu0 %v81
    %107 = vmatpush.msra.mxu0 %v80
    %108 = vmatpush.msra.mxu0 %v79
    %109 = vmatpush.msra.mxu0 %v78
    %110 = vmatpush.msra.mxu0 %v77
    %111 = vmatpush.msra.mxu0 %v76
    %112 = vmatmul.f32.gmra.mxu0 %v74
    %v113 = vpop.f32.mrf.mxu0
    %v114 = vadd.f32 %v94, %v113
    %115 = vmatmul.f32.gmra.mxu0 %v75
    %v116 = vpop.f32.mrf.mxu0
    %v117 = vadd.f32 %v94, %v116
    %118 = vdwg.mxu0
    %v119 = vmax.f32 %v114, 0.0
    %v120 = vmax.f32 %v117, 0.0
    %v121 = vld [vmem:[#allocation8] sm:$0xff]
    %v122 = vld [vmem:[#allocation8 + $0x8] sm:$0xff]
    %v123 = vld [vmem:[#allocation7] sm:$0xff]
    %v124 = vld [vmem:[#allocation7 + $0x8] sm:$0xff]
    %v125 = vld [vmem:[#allocation7 + $0x10] sm:$0xff]
    %v126 = vld [vmem:[#allocation7 + $0x18] sm:$0xff]
    %v127 = vld [vmem:[#allocation7 + $0x20] sm:$0xff]
    %v128 = vld [vmem:[#allocation7 + $0x28] sm:$0xff]
    %v129 = vld [vmem:[#allocation7 + $0x30] sm:$0xff]
    %v130 = vld [vmem:[#allocation7 + $0x38] sm:$0xff]
    %v131 = vld [vmem:[#allocation7 + $0x40] sm:$0xff]
    %v132 = vld [vmem:[#allocation7 + $0x48] sm:$0xff]
    %v133 = vld [vmem:[#allocation7 + $0x50] sm:$0xff]
    %v134 = vld [vmem:[#allocation7 + $0x58] sm:$0xff]
    %v135 = vld [vmem:[#allocation7 + $0x60] sm:$0xff]
    %v136 = vld [vmem:[#allocation7 + $0x68] sm:$0xff]
    %v137 = vld [vmem:[#allocation7 + $0x70] sm:$0xff]
    %v138 = vld [vmem:[#allocation7 + $0x78] sm:$0xff]
    %139 = vmatpush.msra.mxu0 %v138
    %140 = vmatpush.msra.mxu0 %v137
    %141 = vmatpush.msra.mxu0 %v136
    %142 = vmatpush.msra.mxu0 %v135
    %143 = vmatpush.msra.mxu0 %v134
    %144 = vmatpush.msra.mxu0 %v133
    %145 = vmatpush.msra.mxu0 %v132
    %146 = vmatpush.msra.mxu0 %v131
    %147 = vmatpush.msra.mxu0 %v130
    %148 = vmatpush.msra.mxu0 %v129
    %149 = vmatpush.msra.mxu0 %v128
    %150 = vmatpush.msra.mxu0 %v127
    %151 = vmatpush.msra.mxu0 %v126
    %152 = vmatpush.msra.mxu0 %v125
    %153 = vmatpush.msra.mxu0 %v124
    %154 = vmatpush.msra.mxu0 %v123
    %155 = vmatmul.f32.gmra.mxu0 %v119
    %v156 = vpop.f32.mrf.mxu0
    %v157 = vadd.f32 0.0, %v156
    %158 = vmatmul.f32.gmra.mxu0 %v120
    %v159 = vpop.f32.mrf.mxu0
    %v160 = vadd.f32 0.0, %v159
    %161 = vdwg.mxu0
    %v162 = vadd.f32 %v121, %v157
    %v163 = vadd.f32 %v122, %v160
    %164 = vst [vmem:[#allocation8] sm:$0xff] %v162
    %165 = vst [vmem:[#allocation8 + $0x8] sm:$0xff] %v163
    // Predicated region
    $region38: #{tpu_custom_call.1} parent=1 // pred_check
      %p166 = pneg %p68
    $region39: #{tpu_custom_call.1} parent=1 // pred_check_branch
      %168 = sbr.rel (%p166) target = $region41
    $region40: #{tpu_custom_call.1} parent=1 // pred_region
      %v169 = vld [vmem:[#allocation8] sm:$0xff]
      %v170 = vld [vmem:[#allocation8 + $0x8] sm:$0xff]
      %v171 = vld [vmem:[%s4] sm:$0x1]
      %v173 = vperm.slane %v171, 0
      %v175 = vadd.f32 %v169, %v173
      %v176 = vadd.f32 %v170, %v173
      %177 = vst [vmem:[#allocation8] sm:$0xff] %v175
      %178 = vst [vmem:[#allocation8 + $0x8] sm:$0xff] %v176
    $region41: #{tpu_custom_call.1} parent=1 // pred_fallthru
      _
    // Predicated region
    $region42: #{tpu_custom_call.1} parent=1 // pred_check
      _
    $region43: #{tpu_custom_call.1} parent=1 // pred_check_branch
      %180 = sbr.rel (0) target = $region45
    $region44: #{tpu_custom_call.1} parent=1 // pred_region
      %182 = vsyncadd [#allocation4], 0
      %s183 = sshll.u32 [#allocation8], 4
      %s184 = int_to_ptr.vmem [resolvable:$true] %s183
      %s185 = sshll.u32 %s5, 4
      %s186 = int_to_ptr.hbm [resolvable:$true] %s185
      %191 = dma.vmem_to_hbm [thread:$0]  %s184, 256, %s186, [#allocation4], 128, 128, 8
    $region45: #{tpu_custom_call.1} parent=1 // pred_fallthru
      _
    // Predicated region
    $region46: #{tpu_custom_call.1} parent=1 // pred_check
      _
    $region47: #{tpu_custom_call.1} parent=1 // pred_check_branch
      %193 = sbr.rel (0) target = $region49
    $region48: #{tpu_custom_call.1} parent=1 // pred_region
      %195 = dma.done [#allocation4], 256
    $region49: #{tpu_custom_call.1} parent=1 // pred_fallthru
      _
    %196 = vsyncpa [#allocation3], 1
    %197 = vsyncpa [#allocation6], 1
    %198 = vsyncpa [#allocation4], 1

</llo_original>
